<compile_context>
chip_gen: v7x
topology: tpu7x:2x2x1
jax: 0.10.0
libtpu: 0.0.40
codegen_flags: <defaults>
</compile_context>

<pallas_src>
import jax
import jax.numpy as jnp
from jax.experimental import pallas as pl
from jax.experimental.pallas import tpu as pltpu


def _round_up(x, m):
    return (x + m - 1) // m * m


def generator_kernel(z_ref, w1_ref, b1_ref, w2_ref, b2_ref, w3_ref, b3_ref, out_ref):
    wdt = w1_ref.dtype
    # fc1 + relu (f32 accumulation on the MXU)
    h1 = jnp.dot(z_ref[...], w1_ref[...], preferred_element_type=jnp.float32)
    h1 = jnp.maximum(h1 + b1_ref[...].astype(jnp.float32), 0.0)
    # fc2 + relu
    h2 = jnp.dot(h1.astype(wdt), w2_ref[...], preferred_element_type=jnp.float32)
    h2 = jnp.maximum(h2 + b2_ref[...].astype(jnp.float32), 0.0)
    # fc3 (no activation); 270-lane store = 2 full vregs + a small masked vst,
    # cost hidden under the output DMA.
    h3 = jnp.dot(h2.astype(wdt), w3_ref[...], preferred_element_type=jnp.float32)
    out_ref[...] = (h3 + b3_ref[...].astype(jnp.float32)).astype(out_ref.dtype)


def _auto_batch_tile(B):
    """Pick a batch tile: >=2 grid steps once B > 8 (so the 'parallel' grid axis
    can feed both v7x TensorCores), multiples of 256 (MXU M granule on v6e/v7x)
    for large tiles, capped at 1024 rows (double-buffered working set << VMEM)."""
    if B <= 8:
        return 8
    tile = _round_up(pl.cdiv(B, 2), 8)
    if tile >= 256:
        tile = min(_round_up(tile, 256), 1024)
    return tile


def generator_forward(z, params, *, batch_tile=None,
                      compute_dtype=jnp.bfloat16, out_dtype=jnp.float32):
    """3-layer MLP in a single Pallas kernel, tiled over the batch dimension."""
    w1, b1, w2, b2, w3, b3 = params
    B, L = z.shape
    H, H2, OUT = w1.shape[1], w2.shape[1], w3.shape[1]

    # Cast to the compute dtype (bf16 by default: halves input/weight/DMA bytes,
    # fast MXU path on v5e/v6e/v7x; accumulation stays f32 inside the kernel).
    z_c = z.astype(compute_dtype)
    w1, b1, w2, b2, w3, b3 = (a.astype(compute_dtype)
                              for a in (w1, b1, w2, b2, w3, b3))

    if batch_tile is None:
        batch_tile = _auto_batch_tile(B)
    batch_tile = max(8, _round_up(batch_tile, 8))

    # Ragged last block is fine: Pallas masks the out-of-bounds writeback and
    # each output row only depends on its own (possibly-garbage) input row.
    grid = (pl.cdiv(B, batch_tile),)

    def _nbytes(*arrays):
        return sum(int(a.size) * a.dtype.itemsize for a in arrays)

    cost = pl.CostEstimate(
        flops=2 * B * (L * H + H * H2 + H2 * OUT),
        transcendentals=0,
        bytes_accessed=_nbytes(z_c, w1, b1, w2, b2, w3, b3)
        + B * OUT * jnp.dtype(out_dtype).itemsize,
    )

    flat = pl.pallas_call(
        generator_kernel,
        out_shape=jax.ShapeDtypeStruct((B, OUT), out_dtype),
        grid_spec=pltpu.PrefetchScalarGridSpec(
            num_scalar_prefetch=0,
            grid=grid,
            in_specs=[
                pl.BlockSpec((batch_tile, L), lambda i: (i, 0)),   # z tile
                pl.BlockSpec((L, H), lambda i: (0, 0)),            # w1 (full)
                pl.BlockSpec((1, H), lambda i: (0, 0)),            # b1
                pl.BlockSpec((H, H2), lambda i: (0, 0)),           # w2 (full)
                pl.BlockSpec((1, H2), lambda i: (0, 0)),           # b2
                pl.BlockSpec((H2, OUT), lambda i: (0, 0)),         # w3 (full)
                pl.BlockSpec((1, OUT), lambda i: (0, 0)),          # b3
            ],
            out_specs=pl.BlockSpec((batch_tile, OUT), lambda i: (i, 0)),
        ),
        compiler_params=pltpu.CompilerParams(
            dimension_semantics=("parallel",),
        ),
        cost_estimate=cost,
    )(z_c, w1, b1, w2, b2, w3, b3)

    # Only the `.view(-1, 90, 3)` glue remains on the wrapper side.
    return flat.reshape(-1, 90, 3)


def init_generator_params(key, latent_dim, hidden_size):
    """Matches nn.Linear init; weights stored transposed (in, out)."""
    dims = [
        (latent_dim, hidden_size),          # fc1
        (hidden_size, hidden_size // 2),    # fc2
        (hidden_size // 2, 90 * 3),         # fc3
    ]
    params = []
    for (fan_in, fan_out) in dims:
        key, kw, kb = jax.random.split(key, 3)
        bound = 1.0 / jnp.sqrt(fan_in)
        w = jax.random.uniform(kw, (fan_in, fan_out), jnp.float32, -bound, bound)
        b = jax.random.uniform(kb, (1, fan_out), jnp.float32, -bound, bound)
        params += [w, b]
    return tuple(params)


def reference_forward(z, params):
    """Plain-JAX reference for correctness checking."""
    w1, b1, w2, b2, w3, b3 = params
    h = jnp.maximum(z @ w1 + b1, 0.0)
    h = jnp.maximum(h @ w2 + b2, 0.0)
    h = h @ w3 + b3
    return h.reshape(-1, 90, 3)


if __name__ == "__main__":
    latent_dim = 16
    hidden_size = 32
    batch = 16

    key = jax.random.PRNGKey(0)
    kz, kp = jax.random.split(key)
    z = jax.random.normal(kz, (batch, latent_dim), jnp.float32)
    params = init_generator_params(kp, latent_dim, hidden_size)

    # Strict f32 path (auto batch_tile=8 -> 2 grid steps, both TCs on v7x).
    out = jax.block_until_ready(
        generator_forward(z, params, compute_dtype=jnp.float32))
    ref = reference_forward(z, params)
    assert out.shape == (batch, 90, 3), out.shape
    assert jnp.allclose(out, ref, atol=1e-5, rtol=1e-5), "mismatch vs reference (f32)"

    # Default bf16 path + ragged batch (B=40, tile=16 -> grid=3, partial last block).
    z2 = jax.random.normal(kz, (40, latent_dim), jnp.float32)
    out2 = jax.block_until_ready(generator_forward(z2, params, batch_tile=16))
    ref2 = reference_forward(z2, params)
    assert out2.shape == (40, 90, 3), out2.shape
    max_err = jnp.max(jnp.abs(out2 - ref2))
    assert max_err < 5e-2, f"bf16 path drifted too far: {max_err}"

    print("KERNEL_OK")
</pallas_src>

<mosaic_0001>
module attributes {stable_mosaic.version = 11 : i64} {
  func.func @generator_kernel(%arg0: i32, %arg1: memref<8x16xf32, #tpu.memory_space<vmem>>, %arg2: memref<16x32xf32, #tpu.memory_space<vmem>>, %arg3: memref<1x32xf32, #tpu.memory_space<vmem>>, %arg4: memref<32x16xf32, #tpu.memory_space<vmem>>, %arg5: memref<1x16xf32, #tpu.memory_space<vmem>>, %arg6: memref<16x270xf32, #tpu.memory_space<vmem>>, %arg7: memref<1x270xf32, #tpu.memory_space<vmem>>, %arg8: memref<8x270xf32, #tpu.memory_space<vmem>>) attributes {dimension_semantics = [#tpu.dimension_semantics<parallel>], iteration_bounds = array<i64: 2>, scalar_prefetch = 0 : i64, scratch_operands = 0 : i64, tpu.core_type = #tpu.core_type<tc>, window_params = [{transform_indices = @transform_0, window_bounds = array<i64: 8, 16>}, {pipeline_mode = #tpu.pipeline_mode<synchronous>, transform_indices = @transform_1, window_bounds = array<i64: 16, 32>}, {pipeline_mode = #tpu.pipeline_mode<synchronous>, transform_indices = @transform_2, window_bounds = array<i64: 1, 32>}, {pipeline_mode = #tpu.pipeline_mode<synchronous>, transform_indices = @transform_3, window_bounds = array<i64: 32, 16>}, {pipeline_mode = #tpu.pipeline_mode<synchronous>, transform_indices = @transform_4, window_bounds = array<i64: 1, 16>}, {pipeline_mode = #tpu.pipeline_mode<synchronous>, transform_indices = @transform_5, window_bounds = array<i64: 16, 270>}, {pipeline_mode = #tpu.pipeline_mode<synchronous>, transform_indices = @transform_6, window_bounds = array<i64: 1, 270>}, {transform_indices = @transform_7, window_bounds = array<i64: 8, 270>}]} {
    %c0 = arith.constant 0 : index
    %c0_0 = arith.constant 0 : index
    %0 = vector.load %arg1[%c0, %c0_0] : memref<8x16xf32, #tpu.memory_space<vmem>>, vector<8x16xf32>
    %c0_1 = arith.constant 0 : index
    %c0_2 = arith.constant 0 : index
    %1 = vector.load %arg2[%c0_1, %c0_2] : memref<16x32xf32, #tpu.memory_space<vmem>>, vector<16x32xf32>
    %cst = arith.constant dense<0.000000e+00> : vector<8x32xf32>
    %2 = tpu.matmul %0, %1, %cst {dimension_numbers = #tpu.dot_dimension_numbers<[1], [0], [0], [1], [0, 0, 1, 1], [], []>} : vector<8x16xf32>, vector<16x32xf32>, vector<8x32xf32> -> vector<8x32xf32>
    %c0_3 = arith.constant 0 : index
    %c0_4 = arith.constant 0 : index
    %3 = vector.load %arg3[%c0_3, %c0_4] : memref<1x32xf32, #tpu.memory_space<vmem>>, vector<1x32xf32>
    %4 = vector.broadcast %3 : vector<1x32xf32> to vector<8x32xf32>
    %5 = arith.addf %2, %4 : vector<8x32xf32>
    %cst_5 = arith.constant 0.000000e+00 : f32
    %6 = vector.broadcast %cst_5 : f32 to vector<8x32xf32>
    %7 = arith.maximumf %5, %6 : vector<8x32xf32>
    %c0_6 = arith.constant 0 : index
    %c0_7 = arith.constant 0 : index
    %8 = vector.load %arg4[%c0_6, %c0_7] : memref<32x16xf32, #tpu.memory_space<vmem>>, vector<32x16xf32>
    %cst_8 = arith.constant dense<0.000000e+00> : vector<8x16xf32>
    %9 = tpu.matmul %7, %8, %cst_8 {dimension_numbers = #tpu.dot_dimension_numbers<[1], [0], [0], [1], [0, 0, 1, 1], [], []>} : vector<8x32xf32>, vector<32x16xf32>, vector<8x16xf32> -> vector<8x16xf32>
    %c0_9 = arith.constant 0 : index
    %c0_10 = arith.constant 0 : index
    %10 = vector.load %arg5[%c0_9, %c0_10] : memref<1x16xf32, #tpu.memory_space<vmem>>, vector<1x16xf32>
    %11 = vector.broadcast %10 : vector<1x16xf32> to vector<8x16xf32>
    %12 = arith.addf %9, %11 : vector<8x16xf32>
    %cst_11 = arith.constant 0.000000e+00 : f32
    %13 = vector.broadcast %cst_11 : f32 to vector<8x16xf32>
    %14 = arith.maximumf %12, %13 : vector<8x16xf32>
    %c0_12 = arith.constant 0 : index
    %c0_13 = arith.constant 0 : index
    %15 = vector.load %arg6[%c0_12, %c0_13] : memref<16x270xf32, #tpu.memory_space<vmem>>, vector<16x270xf32>
    %cst_14 = arith.constant dense<0.000000e+00> : vector<8x270xf32>
    %16 = tpu.matmul %14, %15, %cst_14 {dimension_numbers = #tpu.dot_dimension_numbers<[1], [0], [0], [1], [0, 0, 1, 1], [], []>} : vector<8x16xf32>, vector<16x270xf32>, vector<8x270xf32> -> vector<8x270xf32>
    %c0_15 = arith.constant 0 : index
    %c0_16 = arith.constant 0 : index
    %17 = vector.load %arg7[%c0_15, %c0_16] : memref<1x270xf32, #tpu.memory_space<vmem>>, vector<1x270xf32>
    %18 = vector.broadcast %17 : vector<1x270xf32> to vector<8x270xf32>
    %19 = arith.addf %16, %18 : vector<8x270xf32>
    %c0_17 = arith.constant 0 : index
    %c0_18 = arith.constant 0 : index
    %20 = vector.load %arg8[%c0_17, %c0_18] : memref<8x270xf32, #tpu.memory_space<vmem>>, vector<8x270xf32>
    tpu.vector_store %arg8[%c0_17, %c0_18], %19 {strides = array<i32>} : memref<8x270xf32, #tpu.memory_space<vmem>>, vector<8x270xf32>,
    return
  }
  func.func @transform_0(%arg0: i32) -> (i32, i32) {
    %c0_i32 = arith.constant 0 : i32
    %c0_i32_0 = arith.constant 0 : i32
    return %arg0, %c0_i32 : i32, i32
  }
  func.func @transform_1(%arg0: i32) -> (i32, i32) {
    %c0_i32 = arith.constant 0 : i32
    %c0_i32_0 = arith.constant 0 : i32
    %c0_i32_1 = arith.constant 0 : i32
    return %c0_i32, %c0_i32_0 : i32, i32
  }
  func.func @transform_2(%arg0: i32) -> (i32, i32) {
    %c0_i32 = arith.constant 0 : i32
    %c0_i32_0 = arith.constant 0 : i32
    %c0_i32_1 = arith.constant 0 : i32
    return %c0_i32, %c0_i32_0 : i32, i32
  }
  func.func @transform_3(%arg0: i32) -> (i32, i32) {
    %c0_i32 = arith.constant 0 : i32
    %c0_i32_0 = arith.constant 0 : i32
    %c0_i32_1 = arith.constant 0 : i32
    return %c0_i32, %c0_i32_0 : i32, i32
  }
  func.func @transform_4(%arg0: i32) -> (i32, i32) {
    %c0_i32 = arith.constant 0 : i32
    %c0_i32_0 = arith.constant 0 : i32
    %c0_i32_1 = arith.constant 0 : i32
    return %c0_i32, %c0_i32_0 : i32, i32
  }
  func.func @transform_5(%arg0: i32) -> (i32, i32) {
    %c0_i32 = arith.constant 0 : i32
    %c0_i32_0 = arith.constant 0 : i32
    %c0_i32_1 = arith.constant 0 : i32
    return %c0_i32, %c0_i32_0 : i32, i32
  }
  func.func @transform_6(%arg0: i32) -> (i32, i32) {
    %c0_i32 = arith.constant 0 : i32
    %c0_i32_0 = arith.constant 0 : i32
    %c0_i32_1 = arith.constant 0 : i32
    return %c0_i32, %c0_i32_0 : i32, i32
  }
  func.func @transform_7(%arg0: i32) -> (i32, i32) {
    %c0_i32 = arith.constant 0 : i32
    %c0_i32_0 = arith.constant 0 : i32
    return %arg0, %c0_i32 : i32, i32
  }
}

</mosaic_0001>

<llo_original>
// kernel: tpu_custom_call.1
$region0: #{tpu_custom_call.1}
  #allocation0 [shape = 'u32[]', space=smem, size = 0x4, offset = 0x4, fixed_abs, tag = 'smem constant byte address 0x4 - core index']
  #allocation1 [shape = 'u32[144,128]{1,0:T(1,128)}', space=vmem, size = 0x12000, scoped, tag = 'internal scratch']
  %s0 = inlined_call_operand.vmem [shape: f32[16,16], index: 0, kind: input, shape index: {}]
  %s1 = inlined_call_operand.hbm [shape: f32[16,32], index: 1, kind: input, shape index: {}]
  %s2 = inlined_call_operand.vmem [shape: f32[1,32], index: 2, kind: input, shape index: {}]
  %s3 = inlined_call_operand.vmem [shape: f32[32,16], index: 3, kind: input, shape index: {}]
  %s4 = inlined_call_operand.vmem [shape: f32[1,16], index: 4, kind: input, shape index: {}]
  %s5 = inlined_call_operand.vmem [shape: f32[16,270], index: 5, kind: input, shape index: {}]
  %s6 = inlined_call_operand.vmem [shape: f32[1,270], index: 6, kind: input, shape index: {}]
  %s7 = inlined_call_operand.hbm [shape: f32[16,270], index: 7, kind: output, shape index: {}]
  %s8 = sld [smem:[#allocation0]]
  $region65: #{tpu_custom_call.1} parent=0
    _
  %s10 = ssub.s32 1, %s8
  %s11 = scalar_select 0, %s10, %s8
  $region1: #{tpu_custom_call.1} parent=0
    #allocation2 [shape = 'u8[8192]{0}', space=vmem, size = 0x2000, scoped, tag = 'input window, operand 1, single buffered']
    #allocation3 [shape = 's32[2]{0}', space=sflag, size = 0x8, scoped, tag = 'scoped memory for tpu_custom_call.1']
    #allocation4 [shape = 's32[2]{0}', space=sflag, size = 0x8, scoped, tag = 'scoped memory for tpu_custom_call.1']
    #allocation5 [shape = 'u8[24576]{0}', space=vmem, size = 0x6000, scoped, tag = 'output window, operand 0']
    %12 = vsyncpa [#allocation3], 0
    %13 = vsyncpa [#allocation4], 0
    %s14 = scalar_lea.sflag [#allocation4], 1
    %15 = vsyncpa %s14, 0
    loop: start=0, step=1, limit=4
    $region2: #{tpu_custom_call.1} parent=1 // loop_pre_header
      _
    $region3: #{tpu_custom_call.1} parent=1 // loop_header
      %s17 = sphi 0, %s21
      %p18 = scmp.ge.s32.totalorder %s17, 4
      %s27 = sphi 0, %s29
      %s30 = sphi 0, %s27
      %s31 = sphi 0, %s30
      %s47 = sphi 0, %s31
      %s51 = sphi 0, %s51
      %s53 = sphi 0, %s51
      %s54 = sphi 0, %s53
      %s68 = sphi 0, %s54
      %s72 = sphi 0, %s72
      %s74 = sphi 0, %s72
      %s75 = sphi 0, %s74
      %s89 = sphi 0, %s75
      %s93 = sphi 0, %s93
      %s95 = sphi 0, %s93
      %s96 = sphi 0, %s95
      %s110 = sphi 0, %s96
      %s114 = sphi 0, %s114
      %s116 = sphi 0, %s114
      %s117 = sphi 0, %s116
      %s131 = sphi 0, %s117
      %s135 = sphi 0, %s135
      %s137 = sphi 0, %s135
      %s138 = sphi 0, %s137
      %s152 = sphi 0, %s138
      %s156 = sphi 0, %s156
      %s158 = sphi 0, %s156
      %s159 = sphi 0, %s158
      %s173 = sphi 0, %s159
      %s179 = sphi 0, %s181
      %s182 = sphi 0, %s179
      %s183 = sphi 0, %s182
      %s199 = sphi 0, %s183
    $region4: #{tpu_custom_call.1} parent=1 // loop_header_branch
      %20 = sbr.rel (%p18) target = $region8
    $region5: #{tpu_custom_call.1} parent=1 // loop_body
      %s22 = ssub.s32 %s17, 1
      %s23 = ssub.s32 %s17, 2
      %s24 = sadd.s32 %s17, 1
      %s25 = ssub.s32 %s17, %s24
      %p26 = scmp.eq.s32.totalorder %s25, 0
      %s28 = sadd.s32 %s27, 1
      %s29 = scalar_select %p26, %s27, %s28
      %p32 = pneg %p26
      %p33 = scmp.eq.s32.totalorder %s17, 1
      %p34 = por %p32, %p33
      %p35 = scmp.ne.s32.totalorder %s27, %s30
      %p36 = scmp.eq.s32.totalorder %s17, 0
      %p37 = por %p35, %p36
      %p38 = scmp.ne.s32.totalorder %s27, %s30
      %p39 = scmp.eq.s32.totalorder %s22, 1
      %p40 = por %p38, %p39
      %p41 = scmp.ne.s32.totalorder %s30, %s31
      %p42 = scmp.eq.s32.totalorder %s22, 0
      %p43 = por %p41, %p42
      %p44 = scmp.ne.s32.totalorder %s30, %s31
      %p45 = scmp.eq.s32.totalorder %s23, 1
      %p46 = por %p44, %p45
      %p48 = scmp.ne.s32.totalorder %s31, %s47
      %p49 = scmp.eq.s32.totalorder %s23, 0
      %p50 = por %p48, %p49
      %s52 = sadd.s32 %s51, 1
      %p55 = scmp.eq.s32.totalorder %s17, 1
      %p56 = scmp.ne.s32.totalorder %s51, %s53
      %p57 = scmp.eq.s32.totalorder %s17, 0
      %p58 = por %p56, %p57
      %p59 = scmp.ne.s32.totalorder %s51, %s53
      %p60 = scmp.eq.s32.totalorder %s22, 1
      %p61 = por %p59, %p60
      %p62 = scmp.ne.s32.totalorder %s53, %s54
      %p63 = scmp.eq.s32.totalorder %s22, 0
      %p64 = por %p62, %p63
      %p65 = scmp.ne.s32.totalorder %s53, %s54
      %p66 = scmp.eq.s32.totalorder %s23, 1
      %p67 = por %p65, %p66
      %p69 = scmp.ne.s32.totalorder %s54, %s68
      %p70 = scmp.eq.s32.totalorder %s23, 0
      %p71 = por %p69, %p70
      %s73 = sadd.s32 %s72, 1
      %p76 = scmp.eq.s32.totalorder %s17, 1
      %p77 = scmp.ne.s32.totalorder %s72, %s74
      %p78 = scmp.eq.s32.totalorder %s17, 0
      %p79 = por %p77, %p78
      %p80 = scmp.ne.s32.totalorder %s72, %s74
      %p81 = scmp.eq.s32.totalorder %s22, 1
      %p82 = por %p80, %p81
      %p83 = scmp.ne.s32.totalorder %s74, %s75
      %p84 = scmp.eq.s32.totalorder %s22, 0
      %p85 = por %p83, %p84
      %p86 = scmp.ne.s32.totalorder %s74, %s75
      %p87 = scmp.eq.s32.totalorder %s23, 1
      %p88 = por %p86, %p87
      %p90 = scmp.ne.s32.totalorder %s75, %s89
      %p91 = scmp.eq.s32.totalorder %s23, 0
      %p92 = por %p90, %p91
      %s94 = sadd.s32 %s93, 1
      %p97 = scmp.eq.s32.totalorder %s17, 1
      %p98 = scmp.ne.s32.totalorder %s93, %s95
      %p99 = scmp.eq.s32.totalorder %s17, 0
      %p100 = por %p98, %p99
      %p101 = scmp.ne.s32.totalorder %s93, %s95
      %p102 = scmp.eq.s32.totalorder %s22, 1
      %p103 = por %p101, %p102
      %p104 = scmp.ne.s32.totalorder %s95, %s96
      %p105 = scmp.eq.s32.totalorder %s22, 0
      %p106 = por %p104, %p105
      %p107 = scmp.ne.s32.totalorder %s95, %s96
      %p108 = scmp.eq.s32.totalorder %s23, 1
      %p109 = por %p107, %p108
      %p111 = scmp.ne.s32.totalorder %s96, %s110
      %p112 = scmp.eq.s32.totalorder %s23, 0
      %p113 = por %p111, %p112
      %s115 = sadd.s32 %s114, 1
      %p118 = scmp.eq.s32.totalorder %s17, 1
      %p119 = scmp.ne.s32.totalorder %s114, %s116
      %p120 = scmp.eq.s32.totalorder %s17, 0
      %p121 = por %p119, %p120
      %p122 = scmp.ne.s32.totalorder %s114, %s116
      %p123 = scmp.eq.s32.totalorder %s22, 1
      %p124 = por %p122, %p123
      %p125 = scmp.ne.s32.totalorder %s116, %s117
      %p126 = scmp.eq.s32.totalorder %s22, 0
      %p127 = por %p125, %p126
      %p128 = scmp.ne.s32.totalorder %s116, %s117
      %p129 = scmp.eq.s32.totalorder %s23, 1
      %p130 = por %p128, %p129
      %p132 = scmp.ne.s32.totalorder %s117, %s131
      %p133 = scmp.eq.s32.totalorder %s23, 0
      %p134 = por %p132, %p133
      %s136 = sadd.s32 %s135, 1
      %p139 = scmp.eq.s32.totalorder %s17, 1
      %p140 = scmp.ne.s32.totalorder %s135, %s137
      %p141 = scmp.eq.s32.totalorder %s17, 0
      %p142 = por %p140, %p141
      %p143 = scmp.ne.s32.totalorder %s135, %s137
      %p144 = scmp.eq.s32.totalorder %s22, 1
      %p145 = por %p143, %p144
      %p146 = scmp.ne.s32.totalorder %s137, %s138
      %p147 = scmp.eq.s32.totalorder %s22, 0
      %p148 = por %p146, %p147
      %p149 = scmp.ne.s32.totalorder %s137, %s138
      %p150 = scmp.eq.s32.totalorder %s23, 1
      %p151 = por %p149, %p150
      %p153 = scmp.ne.s32.totalorder %s138, %s152
      %p154 = scmp.eq.s32.totalorder %s23, 0
      %p155 = por %p153, %p154
      %s157 = sadd.s32 %s156, 1
      %p160 = scmp.eq.s32.totalorder %s17, 1
      %p161 = scmp.ne.s32.totalorder %s156, %s158
      %p162 = scmp.eq.s32.totalorder %s17, 0
      %p163 = por %p161, %p162
      %p164 = scmp.ne.s32.totalorder %s156, %s158
      %p165 = scmp.eq.s32.totalorder %s22, 1
      %p166 = por %p164, %p165
      %p167 = scmp.ne.s32.totalorder %s158, %s159
      %p168 = scmp.eq.s32.totalorder %s22, 0
      %p169 = por %p167, %p168
      %p170 = scmp.ne.s32.totalorder %s158, %s159
      %p171 = scmp.eq.s32.totalorder %s23, 1
      %p172 = por %p170, %p171
      %p174 = scmp.ne.s32.totalorder %s159, %s173
      %p175 = scmp.eq.s32.totalorder %s23, 0
      %p176 = por %p174, %p175
      %s177 = ssub.s32 %s17, %s24
      %p178 = scmp.eq.s32.totalorder %s177, 0
      %s180 = sadd.s32 %s179, 1
      %s181 = scalar_select %p178, %s179, %s180
      %p184 = pneg %p178
      %p185 = scmp.eq.s32.totalorder %s17, 1
      %p186 = por %p184, %p185
      %p187 = scmp.ne.s32.totalorder %s179, %s182
      %p188 = scmp.eq.s32.totalorder %s17, 0
      %p189 = por %p187, %p188
      %p190 = scmp.ne.s32.totalorder %s179, %s182
      %p191 = scmp.eq.s32.totalorder %s22, 1
      %p192 = por %p190, %p191
      %p193 = scmp.ne.s32.totalorder %s182, %s183
      %p194 = scmp.eq.s32.totalorder %s22, 0
      %p195 = por %p193, %p194
      %p196 = scmp.ne.s32.totalorder %s182, %s183
      %p197 = scmp.eq.s32.totalorder %s23, 1
      %p198 = por %p196, %p197
      %p200 = scmp.ne.s32.totalorder %s183, %s199
      %p201 = scmp.eq.s32.totalorder %s23, 0
      %p202 = por %p200, %p201
      %p203 = scmp.le.s32.totalorder 1, %s17
      %p204 = scmp.lt.s32.totalorder %s17, 3
      %p205 = pnand %p203, %p204
      %p206 = pneg %p205
      // Predicated region
      $region9: #{tpu_custom_call.1} parent=5 // pred_check
        _
      $region10: #{tpu_custom_call.1} parent=5 // pred_check_branch
        %208 = sbr.rel (%p205) target = $region12
      $region11: #{tpu_custom_call.1} parent=5 // pred_region
        %s209 = ssub.s32 %s17, 1
        // Predicated region
        $region13: #{tpu_custom_call.1} parent=11 // pred_check
          %p210 = pneg %p64
        $region14: #{tpu_custom_call.1} parent=11 // pred_check_branch
          %212 = sbr.rel (%p210) target = $region16
        $region15: #{tpu_custom_call.1} parent=11 // pred_region
          %s214 = ssub.s32 256, 256
          %215 = vsyncadd [#allocation3], %s214
          %s216 = sshll.u32 [#allocation2], 4
          %s217 = int_to_ptr.vmem [resolvable:$true] %s216
          %222 = dma.hbm_to_vmem [thread:$0]  %s1, 256, %s217, [#allocation3], 128, 128, 8
        $region16: #{tpu_custom_call.1} parent=11 // pred_fallthru
          _
        // Predicated region
        $region17: #{tpu_custom_call.1} parent=11 // pred_check
          %p223 = pneg %p85
        $region18: #{tpu_custom_call.1} parent=11 // pred_check_branch
          %225 = sbr.rel (%p223) target = $region20
        $region19: #{tpu_custom_call.1} parent=11 // pred_region
          _
        $region20: #{tpu_custom_call.1} parent=11 // pred_fallthru
          _
        // Predicated region
        $region21: #{tpu_custom_call.1} parent=11 // pred_check
          %p226 = pneg %p106
        $region22: #{tpu_custom_call.1} parent=11 // pred_check_branch
          %228 = sbr.rel (%p226) target = $region24
        $region23: #{tpu_custom_call.1} parent=11 // pred_region
          _
        $region24: #{tpu_custom_call.1} parent=11 // pred_fallthru
          _
        // Predicated region
        $region25: #{tpu_custom_call.1} parent=11 // pred_check
          %p229 = pneg %p127
        $region26: #{tpu_custom_call.1} parent=11 // pred_check_branch
          %231 = sbr.rel (%p229) target = $region28
        $region27: #{tpu_custom_call.1} parent=11 // pred_region
          _
        $region28: #{tpu_custom_call.1} parent=11 // pred_fallthru
          _
        // Predicated region
        $region29: #{tpu_custom_call.1} parent=11 // pred_check
          %p232 = pneg %p148
        $region30: #{tpu_custom_call.1} parent=11 // pred_check_branch
          %234 = sbr.rel (%p232) target = $region32
        $region31: #{tpu_custom_call.1} parent=11 // pred_region
          _
        $region32: #{tpu_custom_call.1} parent=11 // pred_fallthru
          _
        // Predicated region
        $region33: #{tpu_custom_call.1} parent=11 // pred_check
          %p235 = pneg %p169
        $region34: #{tpu_custom_call.1} parent=11 // pred_check_branch
          %237 = sbr.rel (%p235) target = $region36
        $region35: #{tpu_custom_call.1} parent=11 // pred_region
          _
        $region36: #{tpu_custom_call.1} parent=11 // pred_fallthru
          _
      $region12: #{tpu_custom_call.1} parent=5 // pred_fallthru
        _
      %p238 = scmp.lt.s32.totalorder %s17, 2
      // Predicated region
      $region37: #{tpu_custom_call.1} parent=5 // pred_check
        %p239 = pneg %p238
      $region38: #{tpu_custom_call.1} parent=5 // pred_check_branch
        %241 = sbr.rel (%p239) target = $region40
      $region39: #{tpu_custom_call.1} parent=5 // pred_region
        // Predicated region
        $region41: #{tpu_custom_call.1} parent=39 // pred_check
          %p242 = pneg %p37
        $region42: #{tpu_custom_call.1} parent=39 // pred_check_branch
          %244 = sbr.rel (%p242) target = $region44
        $region43: #{tpu_custom_call.1} parent=39 // pred_region
          %p245 = scmp.lt.s32.totalorder %s17, 1
          %s246 = scalar_select %p245, %s17, 1
          %s247 = smul.addr %s246, 8
          %s248 = scalar_lea.vmem %s0, %s247
        $region44: #{tpu_custom_call.1} parent=39 // pred_fallthru
          _
      $region40: #{tpu_custom_call.1} parent=5 // pred_fallthru
        _
      %p249 = scmp.le.s32.totalorder 1, %s17
      %p250 = scmp.lt.s32.totalorder %s17, 3
      %p251 = pnand %p249, %p250
      %p252 = pneg %p251
      // Predicated region
      $region45: #{tpu_custom_call.1} parent=5 // pred_check
        _
      $region46: #{tpu_custom_call.1} parent=5 // pred_check_branch
        %254 = sbr.rel (%p251) target = $region48
      $region47: #{tpu_custom_call.1} parent=5 // pred_region
        %s255 = ssub.s32 %s17, 1
        // Predicated region
        $region49: #{tpu_custom_call.1} parent=47 // pred_check
          %p256 = pneg %p64
        $region50: #{tpu_custom_call.1} parent=47 // pred_check_branch
          %258 = sbr.rel (%p256) target = $region52
        $region51: #{tpu_custom_call.1} parent=47 // pred_region
          %259 = dma.done [#allocation3], 256
        $region52: #{tpu_custom_call.1} parent=47 // pred_fallthru
          _
        %p260 = scmp.lt.s32.totalorder %s22, 1
        %s261 = scalar_select %p260, %s22, 1
        %s262 = smul.addr %s261, 8
        %s263 = scalar_lea.vmem %s0, %s262
        %p264 = pneg %p43
        %p265 = pneg %p40
        %p266 = pneg %p64
        %p267 = pneg %p61
        %p268 = pneg %p85
        %p269 = pneg %p82
        %p270 = pneg %p106
        %p271 = pneg %p103
        %p272 = pneg %p127
        %p273 = pneg %p124
        %p274 = pneg %p148
        %p275 = pneg %p145
        %p276 = pneg %p169
        %p277 = pneg %p166
        %p278 = pneg %p195
        %p279 = pneg %p192
        %s280 = sand.u32 %s182, 1
        %s281 = scalar_lea.sflag [#allocation4], %s280
        %s282 = sand.u32 %s182, 1
        %s283 = smul.addr %s282, 24
        %s284 = scalar_lea.vmem [#allocation5], %s283
        %p285 = scmp.lt.s32.totalorder %s22, 1
        %s286 = scalar_select %p285, %s22, 1
        %s287 = smul.addr %s286, 8
        %s288 = scalar_lea.vmem %s0, %s287
        %v289 = vld [vmem:[%s288] sm:$0xff]
        %v290 = vld [vmem:[#allocation2] sm:$0xff]
        %v291 = vld [vmem:[#allocation2 + $0x8] sm:$0xff]
        %v292 = vld [vmem:[%s2] sm:$0x1]
        %v294 = vlaneseq
        %v295 = vshrl.u32 %v294, 7
        %v296 = vsub.s32 0, %v295
        %v297 = vrot.slane %v292, %v296
        %vm299 = vcmask 130048
        %v301 = vsel %vm299, %v289, 0
        %303 = vmatprep.subr.mxu0 0.0
        %304 = vmatpush1.msra.mxu0 %v290
        %305 = vmatprep.subr.mxu0 0.0
        %306 = vmatpush1.msra.mxu0 %v291
        %307 = vmatprep.subr.mxu0 0.0
        %308 = vmatpush1.msra.mxu0 0.0
        %309 = vmatprep.subr.mxu0 0.0
        %310 = vmatpush1.msra.mxu0 0.0
        %311 = vmatprep.subr.mxu0 0.0
        %312 = vmatpush1.msra.mxu0 0.0
        %313 = vmatprep.subr.mxu0 0.0
        %314 = vmatpush1.msra.mxu0 0.0
        %315 = vmatprep.subr.mxu0 0.0
        %316 = vmatpush1.msra.mxu0 0.0
        %317 = vmatprep.subr.mxu0 0.0
        %318 = vmatpush1.msra.mxu0 0.0
        %319 = vmatprep.subr.mxu0 0.0
        %320 = vmatpush1.msra.mxu0 0.0
        %321 = vmatprep.subr.mxu0 0.0
        %322 = vmatpush1.msra.mxu0 0.0
        %323 = vmatprep.subr.mxu0 0.0
        %324 = vmatpush1.msra.mxu0 0.0
        %325 = vmatprep.subr.mxu0 0.0
        %326 = vmatpush1.msra.mxu0 0.0
        %327 = vmatprep.subr.mxu0 0.0
        %328 = vmatpush1.msra.mxu0 0.0
        %329 = vmatprep.subr.mxu0 0.0
        %330 = vmatpush1.msra.mxu0 0.0
        %331 = vmatprep.subr.mxu0 0.0
        %332 = vmatpush1.msra.mxu0 0.0
        %333 = vmatprep.subr.mxu0 0.0
        %334 = vmatpush1.msra.mxu0 0.0
        %335 = vmatprep.subr.mxu0 0.0
        %336 = vmatpush1.msra.mxu0 0.0
        %337 = vmatprep.subr.mxu0 0.0
        %338 = vmatpush1.msra.mxu0 0.0
        %339 = vmatprep.subr.mxu0 0.0
        %340 = vmatpush1.msra.mxu0 0.0
        %341 = vmatprep.subr.mxu0 0.0
        %342 = vmatpush1.msra.mxu0 0.0
        %343 = vmatprep.subr.mxu0 0.0
        %344 = vmatpush1.msra.mxu0 0.0
        %345 = vmatprep.subr.mxu0 0.0
        %346 = vmatpush1.msra.mxu0 0.0
        %347 = vmatprep.subr.mxu0 0.0
        %348 = vmatpush1.msra.mxu0 0.0
        %349 = vmatprep.subr.mxu0 0.0
        %350 = vmatpush1.msra.mxu0 0.0
        %351 = vmatprep.subr.mxu0 0.0
        %352 = vmatpush1.msra.mxu0 0.0
        %353 = vmatprep.subr.mxu0 0.0
        %354 = vmatpush1.msra.mxu0 0.0
        %355 = vmatprep.subr.mxu0 0.0
        %356 = vmatpush1.msra.mxu0 0.0
        %357 = vmatprep.subr.mxu0 0.0
        %358 = vmatpush1.msra.mxu0 0.0
        %359 = vmatprep.subr.mxu0 0.0
        %360 = vmatpush1.msra.mxu0 0.0
        %361 = vmatprep.subr.mxu0 0.0
        %362 = vmatpush1.msra.mxu0 0.0
        %363 = vmatprep.subr.mxu0 0.0
        %364 = vmatpush1.msra.mxu0 0.0
        %365 = vmatprep.subr.mxu0 0.0
        %366 = vmatpush1.msra.mxu0 0.0
        %367 = vmatprep.mubr.f32.mxu0 0.0
        %368 = vmatmul.mubr.f32.gmra.mrb[0].mxu0 %v301
        %v369 = vpop.f32.mrb[0].mxu0
        %v370 = vadd.f32 %v297, %v369
        %v371 = vpop.f32.mrb[0].mxu0
        %372 = vdwg.mxu0
        %v373 = vmax.f32 %v370, 0.0
        %v374 = vld [vmem:[%s3] sm:$0xff]
        %v375 = vld [vmem:[%s3 + $0x8] sm:$0xff]
        %v376 = vld [vmem:[%s3 + $0x10] sm:$0xff]
        %v377 = vld [vmem:[%s3 + $0x18] sm:$0xff]
        %v378 = vld [vmem:[%s4] sm:$0x1]
        %v380 = vlaneseq
        %v381 = vshrl.u32 %v380, 7
        %v382 = vsub.s32 0, %v381
        %v383 = vrot.slane %v378, %v382
        %vm385 = vcmask 261120
        %v387 = vsel %vm385, %v373, 0
        %389 = vmatprep.subr.mxu0 0.0
        %390 = vmatpush1.msra.mxu0 %v374
        %391 = vmatprep.subr.mxu0 0.0
        %392 = vmatpush1.msra.mxu0 %v375
        %393 = vmatprep.subr.mxu0 0.0
        %394 = vmatpush1.msra.mxu0 %v376
        %395 = vmatprep.subr.mxu0 0.0
        %396 = vmatpush1.msra.mxu0 %v377
        %397 = vmatprep.subr.mxu0 0.0
        %398 = vmatpush1.msra.mxu0 0.0
        %399 = vmatprep.subr.mxu0 0.0
        %400 = vmatpush1.msra.mxu0 0.0
        %401 = vmatprep.subr.mxu0 0.0
        %402 = vmatpush1.msra.mxu0 0.0
        %403 = vmatprep.subr.mxu0 0.0
        %404 = vmatpush1.msra.mxu0 0.0
        %405 = vmatprep.subr.mxu0 0.0
        %406 = vmatpush1.msra.mxu0 0.0
        %407 = vmatprep.subr.mxu0 0.0
        %408 = vmatpush1.msra.mxu0 0.0
        %409 = vmatprep.subr.mxu0 0.0
        %410 = vmatpush1.msra.mxu0 0.0
        %411 = vmatprep.subr.mxu0 0.0
        %412 = vmatpush1.msra.mxu0 0.0
        %413 = vmatprep.subr.mxu0 0.0
        %414 = vmatpush1.msra.mxu0 0.0
        %415 = vmatprep.subr.mxu0 0.0
        %416 = vmatpush1.msra.mxu0 0.0
        %417 = vmatprep.subr.mxu0 0.0
        %418 = vmatpush1.msra.mxu0 0.0
        %419 = vmatprep.subr.mxu0 0.0
        %420 = vmatpush1.msra.mxu0 0.0
        %421 = vmatprep.subr.mxu0 0.0
        %422 = vmatpush1.msra.mxu0 0.0
        %423 = vmatprep.subr.mxu0 0.0
        %424 = vmatpush1.msra.mxu0 0.0
        %425 = vmatprep.subr.mxu0 0.0
        %426 = vmatpush1.msra.mxu0 0.0
        %427 = vmatprep.subr.mxu0 0.0
        %428 = vmatpush1.msra.mxu0 0.0
        %429 = vmatprep.subr.mxu0 0.0
        %430 = vmatpush1.msra.mxu0 0.0
        %431 = vmatprep.subr.mxu0 0.0
        %432 = vmatpush1.msra.mxu0 0.0
        %433 = vmatprep.subr.mxu0 0.0
        %434 = vmatpush1.msra.mxu0 0.0
        %435 = vmatprep.subr.mxu0 0.0
        %436 = vmatpush1.msra.mxu0 0.0
        %437 = vmatprep.subr.mxu0 0.0
        %438 = vmatpush1.msra.mxu0 0.0
        %439 = vmatprep.subr.mxu0 0.0
        %440 = vmatpush1.msra.mxu0 0.0
        %441 = vmatprep.subr.mxu0 0.0
        %442 = vmatpush1.msra.mxu0 0.0
        %443 = vmatprep.subr.mxu0 0.0
        %444 = vmatpush1.msra.mxu0 0.0
        %445 = vmatprep.subr.mxu0 0.0
        %446 = vmatpush1.msra.mxu0 0.0
        %447 = vmatprep.subr.mxu0 0.0
        %448 = vmatpush1.msra.mxu0 0.0
        %449 = vmatprep.subr.mxu0 0.0
        %450 = vmatpush1.msra.mxu0 0.0
        %451 = vmatprep.subr.mxu0 0.0
        %452 = vmatpush1.msra.mxu0 0.0
        %453 = vmatprep.mubr.f32.mxu0 0.0
        %454 = vmatmul.mubr.f32.gmra.mrb[0].mxu0 %v387
        %v455 = vpop.f32.mrb[0].mxu0
        %v456 = vadd.f32 %v383, %v455
        %v457 = vpop.f32.mrb[0].mxu0
        %458 = vdwg.mxu0
        %v459 = vmax.f32 %v456, 0.0
        %v460 = vld [vmem:[%s5] sm:$0xff]
        %v461 = vld [vmem:[%s5 + $0x8] sm:$0xff]
        %v462 = vld [vmem:[%s5 + $0x10] sm:$0xff]
        %v463 = vld [vmem:[%s5 + $0x18] sm:$0xff]
        %v464 = vld [vmem:[%s5 + $0x20] sm:$0xff]
        %v465 = vld [vmem:[%s5 + $0x28] sm:$0xff]
        %v466 = vld [vmem:[%s6] sm:$0x7]
        %v468 = vlaneseq
        %v469 = vshrl.u32 %v468, 7
        %v470 = vsub.s32 0, %v469
        %v471 = vrot.slane %v466, %v470
        %v472 = vlaneseq
        %v473 = vshrl.u32 %v472, 7
        %v474 = vsub.s32 1, %v473
        %v475 = vrot.slane %v466, %v474
        %v476 = vlaneseq
        %v477 = vshrl.u32 %v476, 7
        %v478 = vsub.s32 2, %v477
        %v479 = vrot.slane %v466, %v478
        %v484 = vsel %vm299, %v459, 0
        %486 = vmatprep.subr.mxu0 %v461
        %487 = vmatpush1.msra.mxu0 %v460
        %488 = vmatprep.subr.mxu0 %v464
        %489 = vmatpush1.msra.mxu0 %v463
        %490 = vmatprep.subr.mxu0 0.0
        %491 = vmatpush1.msra.mxu0 0.0
        %492 = vmatprep.subr.mxu0 0.0
        %493 = vmatpush1.msra.mxu0 0.0
        %494 = vmatprep.subr.mxu0 0.0
        %495 = vmatpush1.msra.mxu0 0.0
        %496 = vmatprep.subr.mxu0 0.0
        %497 = vmatpush1.msra.mxu0 0.0
        %498 = vmatprep.subr.mxu0 0.0
        %499 = vmatpush1.msra.mxu0 0.0
        %500 = vmatprep.subr.mxu0 0.0
        %501 = vmatpush1.msra.mxu0 0.0
        %502 = vmatprep.subr.mxu0 0.0
        %503 = vmatpush1.msra.mxu0 0.0
        %504 = vmatprep.subr.mxu0 0.0
        %505 = vmatpush1.msra.mxu0 0.0
        %506 = vmatprep.subr.mxu0 0.0
        %507 = vmatpush1.msra.mxu0 0.0
        %508 = vmatprep.subr.mxu0 0.0
        %509 = vmatpush1.msra.mxu0 0.0
        %510 = vmatprep.subr.mxu0 0.0
        %511 = vmatpush1.msra.mxu0 0.0
        %512 = vmatprep.subr.mxu0 0.0
        %513 = vmatpush1.msra.mxu0 0.0
        %514 = vmatprep.subr.mxu0 0.0
        %515 = vmatpush1.msra.mxu0 0.0
        %516 = vmatprep.subr.mxu0 0.0
        %517 = vmatpush1.msra.mxu0 0.0
        %518 = vmatprep.subr.mxu0 0.0
        %519 = vmatpush1.msra.mxu0 0.0
        %520 = vmatprep.subr.mxu0 0.0
        %521 = vmatpush1.msra.mxu0 0.0
        %522 = vmatprep.subr.mxu0 0.0
        %523 = vmatpush1.msra.mxu0 0.0
        %524 = vmatprep.subr.mxu0 0.0
        %525 = vmatpush1.msra.mxu0 0.0
        %526 = vmatprep.subr.mxu0 0.0
        %527 = vmatpush1.msra.mxu0 0.0
        %528 = vmatprep.subr.mxu0 0.0
        %529 = vmatpush1.msra.mxu0 0.0
        %530 = vmatprep.subr.mxu0 0.0
        %531 = vmatpush1.msra.mxu0 0.0
        %532 = vmatprep.subr.mxu0 0.0
        %533 = vmatpush1.msra.mxu0 0.0
        %534 = vmatprep.subr.mxu0 0.0
        %535 = vmatpush1.msra.mxu0 0.0
        %536 = vmatprep.subr.mxu0 0.0
        %537 = vmatpush1.msra.mxu0 0.0
        %538 = vmatprep.subr.mxu0 0.0
        %539 = vmatpush1.msra.mxu0 0.0
        %540 = vmatprep.subr.mxu0 0.0
        %541 = vmatpush1.msra.mxu0 0.0
        %542 = vmatprep.subr.mxu0 0.0
        %543 = vmatpush1.msra.mxu0 0.0
        %544 = vmatprep.subr.mxu0 0.0
        %545 = vmatpush1.msra.mxu0 0.0
        %546 = vmatprep.subr.mxu0 0.0
        %547 = vmatpush1.msra.mxu0 0.0
        %548 = vmatprep.subr.mxu0 0.0
        %549 = vmatpush1.msra.mxu0 0.0
        %550 = vmatprep.mubr.f32.mxu0 0.0
        %551 = vmatmul.mubr.f32.gmra.mrb[0].mxu0 %v484
        %v552 = vpop.f32.mrb[0].mxu0
        %v553 = vadd.f32 %v471, %v552
        %v554 = vpop.f32.mrb[0].mxu0
        %v555 = vadd.f32 %v475, %v554
        %556 = vdwg.mxu0
        %557 = vmatprep.subr.mxu0 0.0
        %558 = vmatpush1.msra.mxu0 %v462
        %559 = vmatprep.subr.mxu0 0.0
        %560 = vmatpush1.msra.mxu0 %v465
        %561 = vmatprep.subr.mxu0 0.0
        %562 = vmatpush1.msra.mxu0 0.0
        %563 = vmatprep.subr.mxu0 0.0
        %564 = vmatpush1.msra.mxu0 0.0
        %565 = vmatprep.subr.mxu0 0.0
        %566 = vmatpush1.msra.mxu0 0.0
        %567 = vmatprep.subr.mxu0 0.0
        %568 = vmatpush1.msra.mxu0 0.0
        %569 = vmatprep.subr.mxu0 0.0
        %570 = vmatpush1.msra.mxu0 0.0
        %571 = vmatprep.subr.mxu0 0.0
        %572 = vmatpush1.msra.mxu0 0.0
        %573 = vmatprep.subr.mxu0 0.0
        %574 = vmatpush1.msra.mxu0 0.0
        %575 = vmatprep.subr.mxu0 0.0
        %576 = vmatpush1.msra.mxu0 0.0
        %577 = vmatprep.subr.mxu0 0.0
        %578 = vmatpush1.msra.mxu0 0.0
        %579 = vmatprep.subr.mxu0 0.0
        %580 = vmatpush1.msra.mxu0 0.0
        %581 = vmatprep.subr.mxu0 0.0
        %582 = vmatpush1.msra.mxu0 0.0
        %583 = vmatprep.subr.mxu0 0.0
        %584 = vmatpush1.msra.mxu0 0.0
        %585 = vmatprep.subr.mxu0 0.0
        %586 = vmatpush1.msra.mxu0 0.0
        %587 = vmatprep.subr.mxu0 0.0
        %588 = vmatpush1.msra.mxu0 0.0
        %589 = vmatprep.subr.mxu0 0.0
        %590 = vmatpush1.msra.mxu0 0.0
        %591 = vmatprep.subr.mxu0 0.0
        %592 = vmatpush1.msra.mxu0 0.0
        %593 = vmatprep.subr.mxu0 0.0
        %594 = vmatpush1.msra.mxu0 0.0
        %595 = vmatprep.subr.mxu0 0.0
        %596 = vmatpush1.msra.mxu0 0.0
        %597 = vmatprep.subr.mxu0 0.0
        %598 = vmatpush1.msra.mxu0 0.0
        %599 = vmatprep.subr.mxu0 0.0
        %600 = vmatpush1.msra.mxu0 0.0
        %601 = vmatprep.subr.mxu0 0.0
        %602 = vmatpush1.msra.mxu0 0.0
        %603 = vmatprep.subr.mxu0 0.0
        %604 = vmatpush1.msra.mxu0 0.0
        %605 = vmatprep.subr.mxu0 0.0
        %606 = vmatpush1.msra.mxu0 0.0
        %607 = vmatprep.subr.mxu0 0.0
        %608 = vmatpush1.msra.mxu0 0.0
        %609 = vmatprep.subr.mxu0 0.0
        %610 = vmatpush1.msra.mxu0 0.0
        %611 = vmatprep.subr.mxu0 0.0
        %612 = vmatpush1.msra.mxu0 0.0
        %613 = vmatprep.subr.mxu0 0.0
        %614 = vmatpush1.msra.mxu0 0.0
        %615 = vmatprep.subr.mxu0 0.0
        %616 = vmatpush1.msra.mxu0 0.0
        %617 = vmatprep.subr.mxu0 0.0
        %618 = vmatpush1.msra.mxu0 0.0
        %619 = vmatprep.subr.mxu0 0.0
        %620 = vmatpush1.msra.mxu0 0.0
        %621 = vmatprep.mubr.f32.mxu0 0.0
        %622 = vmatmul.mubr.f32.gmra.mrb[0].mxu0 %v484
        %v623 = vpop.f32.mrb[0].mxu0
        %v624 = vadd.f32 %v479, %v623
        %v625 = vpop.f32.mrb[0].mxu0
        %626 = vdwg.mxu0
        %627 = vst [vmem:[%s284] sm:$0xff] %v553
        %628 = vst [vmem:[%s284 + $0x8] sm:$0xff] %v555
        %vm629 = vcmask 113664
        %630 = vst.msk [vmem:[%s284 + $0x10] sm:$0xff] %vm629, %v624
        %s631 = sand.u32 %s182, 1
        %s632 = scalar_lea.sflag [#allocation4], %s631
        %s633 = sand.u32 %s182, 1
        %s634 = smul.addr %s633, 24
        %s635 = scalar_lea.vmem [#allocation5], %s634
        // Predicated region
        $region53: #{tpu_custom_call.1} parent=47 // pred_check
          %p636 = pneg %p192
        $region54: #{tpu_custom_call.1} parent=47 // pred_check_branch
          %638 = sbr.rel (%p636) target = $region56
        $region55: #{tpu_custom_call.1} parent=47 // pred_region
          %s640 = ssub.s32 384, 384
          %641 = vsyncadd %s632, %s640
          %s642 = smul.addr %s22, 3
          %s643 = smul.addr %s642, 128
          %s644 = scalar_lea.hbm %s7, %s643
          %s646 = sshll.u32 %s635, 4
          %s647 = int_to_ptr.vmem [resolvable:$true] %s646
          %649 = dma.vmem_to_hbm [thread:$0]  %s647, 384, %s644, %s632
        $region56: #{tpu_custom_call.1} parent=47 // pred_fallthru
          _
      $region48: #{tpu_custom_call.1} parent=5 // pred_fallthru
        _
      %p650 = scmp.le.s32.totalorder 2, %s17
      // Predicated region
      $region57: #{tpu_custom_call.1} parent=5 // pred_check
        %p651 = pneg %p650
      $region58: #{tpu_custom_call.1} parent=5 // pred_check_branch
        %653 = sbr.rel (%p651) target = $region60
      $region59: #{tpu_custom_call.1} parent=5 // pred_region
        %s654 = ssub.s32 %s17, 2
        // Predicated region
        $region61: #{tpu_custom_call.1} parent=59 // pred_check
          %p655 = pneg %p198
        $region62: #{tpu_custom_call.1} parent=59 // pred_check_branch
          %657 = sbr.rel (%p655) target = $region64
        $region63: #{tpu_custom_call.1} parent=59 // pred_region
          %s658 = sand.u32 %s183, 1
          %s659 = scalar_lea.sflag [#allocation4], %s658
          %s660 = sand.u32 %s183, 1
          %s661 = smul.addr %s660, 24
          %s662 = scalar_lea.vmem [#allocation5], %s661
          %663 = dma.done %s659, 384
        $region64: #{tpu_custom_call.1} parent=59 // pred_fallthru
          _
      $region60: #{tpu_custom_call.1} parent=5 // pred_fallthru
        _
    $region6: #{tpu_custom_call.1} parent=1 // loop_footer
      %s21 = sadd.s32 1, %s17
    $region7: #{tpu_custom_call.1} parent=1 // loop_footer_branch
      %16 = sbr.rel target = $region3
    $region8: #{tpu_custom_call.1} parent=1 // loop_exit
      _
    %664 = vsyncpa [#allocation3], 1
    %s665 = scalar_lea.sflag [#allocation3], 1
    %666 = vsyncpa %s665, 1
    %667 = vsyncpa [#allocation4], 1
    %s668 = scalar_lea.sflag [#allocation4], 1
    %669 = vsyncpa %s668, 1

</llo_original>
